<compile_context>
chip_gen: v6e
topology: v6e:2x2x1
jax: 0.10.0
libtpu: 0.0.40
codegen_flags: <defaults>
</compile_context>

<pallas_src>
import math

import jax
import jax.numpy as jnp
from jax.experimental import pallas as pl
from jax.experimental.pallas import tpu as pltpu

LANES = 128


def _round_up(v, m):
    return (v + m - 1) // m * m


def _full_spec(shape):
    """Whole-array-in-VMEM BlockSpec (grid = (), tiny problem sizes)."""
    return pl.BlockSpec(shape, lambda: (0,) * len(shape))


# ----------------------------------------------------------------------------
# Fused Pallas kernel
# ----------------------------------------------------------------------------

def _make_infograph_kernel(n_nodes, n_graphs, hidden, n_layers, stack_rows,
                           x_off, a_off, s_off, pm_off):
    """Build the fully fused InfoGraph forward kernel.

    Refs: data_slab (rows,128) bf16, enc_slab (128, 2*L*H) bf16, ff_slab (6E, 2E) bf16,
          loss (1,1) f32 SMEM output.
    """
    e_dim = hidden * n_layers
    log2 = math.log(2.0)              # plain Python float (NOT a captured jnp constant)

    def bf16(v):
        return v.astype(jnp.bfloat16)

    def mm(a, b):                     # MXU matmul, bf16 operands, f32 accumulate
        return jnp.dot(a, b, preferred_element_type=jnp.float32)

    def softplus(v):                  # numerically stable softplus (f32)
        return jnp.maximum(v, 0.0) + jnp.log1p(jnp.exp(-jnp.abs(v)))

    def batchnorm(v):                 # torch BatchNorm1d training stats, weight=1 / bias=0
        mean = jnp.mean(v, axis=0, keepdims=True)
        ctr = v - mean
        var = jnp.mean(ctr * ctr, axis=0, keepdims=True)       # biased, like torch
        return ctr * jax.lax.rsqrt(var + 1e-5)

    def kernel(data_ref, encw_ref, ffw_ref, loss_ref):
        # ----- Encoder: GINConv(eps=0) -> ReLU -> BatchNorm1d, x num_gc_layers -----
        a_hat = data_ref[a_off:a_off + n_nodes, :n_nodes]           # (N, N) bf16  (A + I)
        h = data_ref[x_off:x_off + n_nodes, :]                      # (N, 128) bf16, zero-padded feats

        hs = []
        for layer in range(n_layers):
            c = 2 * layer * hidden
            if layer == 0:
                w1 = encw_ref[:, c:c + hidden]                      # (128, H): zero rows past f_in
            else:
                w1 = encw_ref[:hidden, c:c + hidden]                # (H, H)
            w2 = encw_ref[:hidden, c + hidden:c + 2 * hidden]       # (H, H)

            # GINConv(eps=0): nn((1+0)*x + sum_neigh x) = nn(A_hat @ h); nn = Lin->ReLU->Lin,
            # then the encoder's outer F.relu.
            agg = mm(a_hat, h)                                      # f32
            h1 = jnp.maximum(mm(bf16(agg), w1), 0.0)
            h2 = jnp.maximum(mm(bf16(h1), w2), 0.0)
            hbn = batchnorm(h2)                                     # f32 (N, H)
            hs.append(hbn)
            h = bf16(hbn)

        # M = cat(xs): stays in vregs (no VMEM scratch / masked partial stores).
        m = jnp.concatenate(hs, axis=1)                             # f32 (N, E)

        # ----- global_add_pool + row stack in ONE matmul: S @ M = [M ; y ; 0] -----
        s_mat = data_ref[s_off:s_off + stack_rows, :n_nodes]        # (SR, N) bf16
        stack = mm(s_mat, bf16(m))                                  # f32 (SR, E)

        # ----- local_d / global_d FF towers, fused & lane-dense (128 wide) -----
        w1a = ffw_ref[0:e_dim, :]                   # [w1_l | w1_g]          (E, 2E)
        wsa = ffw_ref[e_dim:2 * e_dim, :]           # [ws_l | ws_g]          (E, 2E)
        w2b = ffw_ref[2 * e_dim:4 * e_dim, :]       # blockdiag(w2_l, w2_g)  (2E, 2E)
        w3b = ffw_ref[4 * e_dim:6 * e_dim, :]       # blockdiag(w3_l, w3_g)  (2E, 2E)

        sb = bf16(stack)
        h1 = jnp.maximum(mm(sb, w1a), 0.0)          # (SR, 2E): [:E] local, [E:] global
        sc = mm(sb, wsa)                            # linear shortcut, both towers
        h2 = jnp.maximum(mm(bf16(h1), w2b), 0.0)    # block-diag -> no cross-tower talk
        h3 = jnp.maximum(mm(bf16(h2), w3b), 0.0)
        out = h3 + sc                               # f32 (SR, 2E)

        l_enc = out[:n_nodes, :e_dim]                               # local_d(M)  (N, E)
        g_enc = out[n_nodes:n_nodes + n_graphs, e_dim:]             # global_d(y) (G, E)

        # ----- local_global_loss_(l_enc, g_enc, batch, 'JSD') -----
        # res[n, g] = <l_enc[n], g_enc[g]> : contract E axes directly (no transpose).
        res = jax.lax.dot_general(bf16(l_enc), bf16(g_enc),
                                  (((1,), (1,)), ((), ())),
                                  preferred_element_type=jnp.float32)   # (N, G) f32

        pos = data_ref[pm_off:pm_off + n_nodes, :n_graphs].astype(jnp.float32)
        neg = 1.0 - pos
        sp = softplus(-res)                         # one transcendental pass, mask afterwards
        e_pos = jnp.sum(pos * (log2 - sp))          # masked entries contribute exactly 0
        e_neg = jnp.sum(neg * (sp + res - log2))    # masked entries contribute exactly 0

        loss_ref[0, 0] = e_neg / (n_nodes * (n_graphs - 1)) - e_pos / n_nodes

    return kernel


# ----------------------------------------------------------------------------
# Host wrapper: pack inputs into 3 slabs, launch one grid-less pallas_call
# ----------------------------------------------------------------------------

def infograph_forward(x, a_hat, pos_mask, enc_ws, local_ws, global_ws):
    """Fused InfoGraph forward (a=0.0, prior=False).

    enc_ws   : list of (w1, w2) per GIN layer (biases zero per init_emb -> dropped)
    local_ws / global_ws : (w1, w2, w3, ws) for each FF tower
    """
    n_nodes, f_in = x.shape
    n_graphs = pos_mask.shape[1]
    assert n_graphs > 1, "JSD loss divides by (num_graphs - 1); need >= 2 graphs"
    n_layers = len(enc_ws)
    hidden = enc_ws[0][1].shape[0]
    e_dim = hidden * n_layers
    assert n_nodes % 8 == 0 and hidden % 8 == 0
    assert n_nodes <= LANES and f_in <= LANES and 2 * e_dim <= LANES

    f32 = jnp.float32
    stack_rows = _round_up(n_nodes + n_graphs, 8)
    x_off = 0
    a_off = x_off + n_nodes
    s_off = a_off + n_nodes
    pm_off = s_off + stack_rows
    data_rows = _round_up(pm_off + n_nodes, 8)

    # Pool+stack matrix: S = [I_N ; pos_mask^T ; 0]  so  S @ M = [M ; y ; 0].
    s_mat = jnp.zeros((stack_rows, n_nodes), f32)
    s_mat = s_mat.at[:n_nodes, :].set(jnp.eye(n_nodes, dtype=f32))
    s_mat = s_mat.at[n_nodes:n_nodes + n_graphs, :].set(pos_mask.T)

    # Slab 1: node data / graph structure / masks (one DMA).
    data_slab = jnp.zeros((data_rows, LANES), f32)
    data_slab = data_slab.at[x_off:x_off + n_nodes, :f_in].set(x)
    data_slab = data_slab.at[a_off:a_off + n_nodes, :n_nodes].set(a_hat)
    data_slab = data_slab.at[s_off:s_off + stack_rows, :n_nodes].set(s_mat)
    data_slab = data_slab.at[pm_off:pm_off + n_nodes, :n_graphs].set(pos_mask)

    # Slab 2: encoder GIN-MLP weights, column blocks [w1_0 | w2_0 | w1_1 | w2_1 | ...].
    enc_slab = jnp.zeros((LANES, 2 * n_layers * hidden), f32)
    for layer, (w1, w2) in enumerate(enc_ws):
        c = 2 * layer * hidden
        enc_slab = enc_slab.at[:w1.shape[0], c:c + hidden].set(w1)
        enc_slab = enc_slab.at[:hidden, c + hidden:c + 2 * hidden].set(w2)

    # Slab 3: both FF towers packed lane-dense / block-diagonally.
    def blockdiag(wl, wg):
        z = jnp.zeros((e_dim, e_dim), f32)
        return jnp.block([[wl, z], [z, wg]])

    lw1, lw2, lw3, lws = local_ws
    gw1, gw2, gw3, gws = global_ws
    ff_slab = jnp.concatenate([
        jnp.concatenate([lw1, gw1], axis=1),      # (E, 2E)
        jnp.concatenate([lws, gws], axis=1),      # (E, 2E)
        blockdiag(lw2, gw2),                      # (2E, 2E)
        blockdiag(lw3, gw3),                      # (2E, 2E)
    ], axis=0)                                    # (6E, 2E)

    # bf16 over the DMA and on the MXU; BN stats + JSD loss stay f32 in-kernel.
    data_slab = data_slab.astype(jnp.bfloat16)
    enc_slab = enc_slab.astype(jnp.bfloat16)
    ff_slab = ff_slab.astype(jnp.bfloat16)

    kernel = _make_infograph_kernel(n_nodes, n_graphs, hidden, n_layers, stack_rows,
                                    x_off, a_off, s_off, pm_off)
    loss = pl.pallas_call(
        kernel,
        out_shape=jax.ShapeDtypeStruct((1, 1), jnp.float32),
        in_specs=[_full_spec(data_slab.shape),
                  _full_spec(enc_slab.shape),
                  _full_spec(ff_slab.shape)],
        out_specs=pl.BlockSpec(memory_space=pltpu.MemorySpace.SMEM),
    )(data_slab, enc_slab, ff_slab)
    return loss[0, 0]


# ----------------------------------------------------------------------------
# Deterministic parameter / input construction
# ----------------------------------------------------------------------------

def xavier_uniform(key, fan_in, fan_out):
    limit = math.sqrt(6.0 / (fan_in + fan_out))
    return jax.random.uniform(key, (fan_in, fan_out), jnp.float32, -limit, limit)


if __name__ == "__main__":
    # Small shapes implied by the module: 2 graphs x 8 nodes, 4 input features,
    # hidden_dim=32, num_gc_layers=2 -> embedding_dim E = 64.
    N_NODES, F_IN, HIDDEN, N_LAYERS, N_GRAPHS = 16, 4, 32, 2, 2
    E_DIM = HIDDEN * N_LAYERS
    npg = N_NODES // N_GRAPHS

    # Deterministic graph: a ring within each graph.
    rows, cols = [], []
    for g in range(N_GRAPHS):
        base = g * npg
        for i in range(npg):
            u, v = base + i, base + (i + 1) % npg
            rows += [u, v]
            cols += [v, u]
    adj = jnp.zeros((N_NODES, N_NODES), jnp.float32)
    adj = adj.at[jnp.array(rows), jnp.array(cols)].set(1.0)
    a_hat = adj + jnp.eye(N_NODES, dtype=jnp.float32)               # (A + I), GINConv eps=0

    batch = jnp.repeat(jnp.arange(N_GRAPHS), npg)                   # node -> graph id
    pos_mask = jax.nn.one_hot(batch, N_GRAPHS, dtype=jnp.float32)   # (N, G)

    key = jax.random.PRNGKey(0)
    keys = iter(jax.random.split(key, 32))

    x = jax.random.normal(next(keys), (N_NODES, F_IN), jnp.float32)

    # Encoder GIN-MLP params (biases are zero per init_emb and therefore dropped).
    enc_ws = []
    in_dim = F_IN
    for _ in range(N_LAYERS):
        w1 = xavier_uniform(next(keys), in_dim, HIDDEN)
        w2 = xavier_uniform(next(keys), HIDDEN, HIDDEN)
        enc_ws.append((w1, w2))
        in_dim = HIDDEN

    def make_ff_params():
        # (w1, w2, w3, ws) — packed into the FF slab inside infograph_forward.
        return tuple(xavier_uniform(next(keys), E_DIM, E_DIM) for _ in range(4))

    local_ws = make_ff_params()
    global_ws = make_ff_params()

    loss = infograph_forward(x, a_hat, pos_mask, enc_ws, local_ws, global_ws)
    loss = jax.block_until_ready(loss)
    assert jnp.isfinite(loss), "loss is not finite"
    print("KERNEL_OK")
</pallas_src>

<mosaic_0001>
module attributes {stable_mosaic.version = 11 : i64} {
  func.func @kernel(%arg0: memref<72x128xbf16, #tpu.memory_space<vmem>>, %arg1: memref<128x128xbf16, #tpu.memory_space<vmem>>, %arg2: memref<384x128xbf16, #tpu.memory_space<vmem>>, %arg3: memref<1x1xf32, #tpu.memory_space<smem>>) attributes {dimension_semantics = [], scalar_prefetch = 0 : i64, scratch_operands = 0 : i64, tpu.core_type = #tpu.core_type<tc>} {
    %c16 = arith.constant 16 : index
    %c0 = arith.constant 0 : index
    %0 = vector.load %arg0[%c16, %c0] : memref<72x128xbf16, #tpu.memory_space<vmem>>, vector<16x16xbf16>
    %c0_0 = arith.constant 0 : index
    %c0_1 = arith.constant 0 : index
    %1 = vector.load %arg0[%c0_0, %c0_1] : memref<72x128xbf16, #tpu.memory_space<vmem>>, vector<16x128xbf16>
    %c0_2 = arith.constant 0 : index
    %c0_3 = arith.constant 0 : index
    %2 = vector.load %arg1[%c0_2, %c0_3] : memref<128x128xbf16, #tpu.memory_space<vmem>>, vector<128x32xbf16>
    %c0_4 = arith.constant 0 : index
    %c32 = arith.constant 32 : index
    %3 = vector.load %arg1[%c0_4, %c32] : memref<128x128xbf16, #tpu.memory_space<vmem>>, vector<32x32xbf16>
    %cst = arith.constant dense<0.000000e+00> : vector<16x128xf32>
    %4 = tpu.matmul %0, %1, %cst {dimension_numbers = #tpu.dot_dimension_numbers<[1], [0], [0], [1], [0, 0, 1, 1], [], []>} : vector<16x16xbf16>, vector<16x128xbf16>, vector<16x128xf32> -> vector<16x128xf32>
    %5 = arith.truncf %4 : vector<16x128xf32> to vector<16x128xbf16>
    %cst_5 = arith.constant dense<0.000000e+00> : vector<16x32xf32>
    %6 = tpu.matmul %5, %2, %cst_5 {dimension_numbers = #tpu.dot_dimension_numbers<[1], [0], [0], [1], [0, 0, 1, 1], [], []>} : vector<16x128xbf16>, vector<128x32xbf16>, vector<16x32xf32> -> vector<16x32xf32>
    %cst_6 = arith.constant 0.000000e+00 : f32
    %7 = vector.broadcast %cst_6 : f32 to vector<16x32xf32>
    %8 = arith.maximumf %6, %7 : vector<16x32xf32>
    %9 = arith.truncf %8 : vector<16x32xf32> to vector<16x32xbf16>
    %cst_7 = arith.constant dense<0.000000e+00> : vector<16x32xf32>
    %10 = tpu.matmul %9, %3, %cst_7 {dimension_numbers = #tpu.dot_dimension_numbers<[1], [0], [0], [1], [0, 0, 1, 1], [], []>} : vector<16x32xbf16>, vector<32x32xbf16>, vector<16x32xf32> -> vector<16x32xf32>
    %cst_8 = arith.constant 0.000000e+00 : f32
    %11 = vector.broadcast %cst_8 : f32 to vector<16x32xf32>
    %12 = arith.maximumf %10, %11 : vector<16x32xf32>
    %cst_9 = arith.constant dense<0.000000e+00> : vector<32xf32>
    %13 = vector.multi_reduction <add>, %12, %cst_9 [0] : vector<16x32xf32> to vector<32xf32>
    %14 = vector.shape_cast %13 : vector<32xf32> to vector<1x32xf32>
    %cst_10 = arith.constant 1.600000e+01 : f32
    %15 = vector.broadcast %cst_10 : f32 to vector<1x32xf32>
    %16 = arith.divf %14, %15 : vector<1x32xf32>
    %17 = vector.broadcast %16 : vector<1x32xf32> to vector<16x32xf32>
    %18 = arith.subf %12, %17 : vector<16x32xf32>
    %19 = arith.mulf %18, %18 : vector<16x32xf32>
    %cst_11 = arith.constant dense<0.000000e+00> : vector<32xf32>
    %20 = vector.multi_reduction <add>, %19, %cst_11 [0] : vector<16x32xf32> to vector<32xf32>
    %21 = vector.shape_cast %20 : vector<32xf32> to vector<1x32xf32>
    %cst_12 = arith.constant 1.600000e+01 : f32
    %22 = vector.broadcast %cst_12 : f32 to vector<1x32xf32>
    %23 = arith.divf %21, %22 : vector<1x32xf32>
    %cst_13 = arith.constant 9.99999974E-6 : f32
    %24 = vector.broadcast %cst_13 : f32 to vector<1x32xf32>
    %25 = arith.addf %23, %24 : vector<1x32xf32>
    %26 = math.rsqrt %25 : vector<1x32xf32>
    %27 = vector.broadcast %26 : vector<1x32xf32> to vector<16x32xf32>
    %28 = arith.mulf %18, %27 : vector<16x32xf32>
    %29 = arith.truncf %28 : vector<16x32xf32> to vector<16x32xbf16>
    %c0_14 = arith.constant 0 : index
    %c64 = arith.constant 64 : index
    %30 = vector.load %arg1[%c0_14, %c64] : memref<128x128xbf16, #tpu.memory_space<vmem>>, vector<32x32xbf16>
    %c0_15 = arith.constant 0 : index
    %c96 = arith.constant 96 : index
    %31 = vector.load %arg1[%c0_15, %c96] : memref<128x128xbf16, #tpu.memory_space<vmem>>, vector<32x32xbf16>
    %cst_16 = arith.constant dense<0.000000e+00> : vector<16x32xf32>
    %32 = tpu.matmul %0, %29, %cst_16 {dimension_numbers = #tpu.dot_dimension_numbers<[1], [0], [0], [1], [0, 0, 1, 1], [], []>} : vector<16x16xbf16>, vector<16x32xbf16>, vector<16x32xf32> -> vector<16x32xf32>
    %33 = arith.truncf %32 : vector<16x32xf32> to vector<16x32xbf16>
    %cst_17 = arith.constant dense<0.000000e+00> : vector<16x32xf32>
    %34 = tpu.matmul %33, %30, %cst_17 {dimension_numbers = #tpu.dot_dimension_numbers<[1], [0], [0], [1], [0, 0, 1, 1], [], []>} : vector<16x32xbf16>, vector<32x32xbf16>, vector<16x32xf32> -> vector<16x32xf32>
    %cst_18 = arith.constant 0.000000e+00 : f32
    %35 = vector.broadcast %cst_18 : f32 to vector<16x32xf32>
    %36 = arith.maximumf %34, %35 : vector<16x32xf32>
    %37 = arith.truncf %36 : vector<16x32xf32> to vector<16x32xbf16>
    %cst_19 = arith.constant dense<0.000000e+00> : vector<16x32xf32>
    %38 = tpu.matmul %37, %31, %cst_19 {dimension_numbers = #tpu.dot_dimension_numbers<[1], [0], [0], [1], [0, 0, 1, 1], [], []>} : vector<16x32xbf16>, vector<32x32xbf16>, vector<16x32xf32> -> vector<16x32xf32>
    %cst_20 = arith.constant 0.000000e+00 : f32
    %39 = vector.broadcast %cst_20 : f32 to vector<16x32xf32>
    %40 = arith.maximumf %38, %39 : vector<16x32xf32>
    %cst_21 = arith.constant dense<0.000000e+00> : vector<32xf32>
    %41 = vector.multi_reduction <add>, %40, %cst_21 [0] : vector<16x32xf32> to vector<32xf32>
    %42 = vector.shape_cast %41 : vector<32xf32> to vector<1x32xf32>
    %cst_22 = arith.constant 1.600000e+01 : f32
    %43 = vector.broadcast %cst_22 : f32 to vector<1x32xf32>
    %44 = arith.divf %42, %43 : vector<1x32xf32>
    %45 = vector.broadcast %44 : vector<1x32xf32> to vector<16x32xf32>
    %46 = arith.subf %40, %45 : vector<16x32xf32>
    %47 = arith.mulf %46, %46 : vector<16x32xf32>
    %cst_23 = arith.constant dense<0.000000e+00> : vector<32xf32>
    %48 = vector.multi_reduction <add>, %47, %cst_23 [0] : vector<16x32xf32> to vector<32xf32>
    %49 = vector.shape_cast %48 : vector<32xf32> to vector<1x32xf32>
    %cst_24 = arith.constant 1.600000e+01 : f32
    %50 = vector.broadcast %cst_24 : f32 to vector<1x32xf32>
    %51 = arith.divf %49, %50 : vector<1x32xf32>
    %cst_25 = arith.constant 9.99999974E-6 : f32
    %52 = vector.broadcast %cst_25 : f32 to vector<1x32xf32>
    %53 = arith.addf %51, %52 : vector<1x32xf32>
    %54 = math.rsqrt %53 : vector<1x32xf32>
    %55 = vector.broadcast %54 : vector<1x32xf32> to vector<16x32xf32>
    %56 = arith.mulf %46, %55 : vector<16x32xf32>
    %57 = tpu.concatenate %28, %56 in 1 : vector<16x32xf32>, vector<16x32xf32> -> vector<16x64xf32>
    %c32_26 = arith.constant 32 : index
    %c0_27 = arith.constant 0 : index
    %58 = vector.load %arg0[%c32_26, %c0_27] : memref<72x128xbf16, #tpu.memory_space<vmem>>, vector<24x16xbf16>
    %59 = arith.truncf %57 : vector<16x64xf32> to vector<16x64xbf16>
    %cst_28 = arith.constant dense<0.000000e+00> : vector<24x64xf32>
    %60 = tpu.matmul %58, %59, %cst_28 {dimension_numbers = #tpu.dot_dimension_numbers<[1], [0], [0], [1], [0, 0, 1, 1], [], []>} : vector<24x16xbf16>, vector<16x64xbf16>, vector<24x64xf32> -> vector<24x64xf32>
    %c0_29 = arith.constant 0 : index
    %c0_30 = arith.constant 0 : index
    %61 = vector.load %arg2[%c0_29, %c0_30] : memref<384x128xbf16, #tpu.memory_space<vmem>>, vector<64x128xbf16>
    %c64_31 = arith.constant 64 : index
    %c0_32 = arith.constant 0 : index
    %62 = vector.load %arg2[%c64_31, %c0_32] : memref<384x128xbf16, #tpu.memory_space<vmem>>, vector<64x128xbf16>
    %c128 = arith.constant 128 : index
    %c0_33 = arith.constant 0 : index
    %63 = vector.load %arg2[%c128, %c0_33] : memref<384x128xbf16, #tpu.memory_space<vmem>>, vector<128x128xbf16>
    %c256 = arith.constant 256 : index
    %c0_34 = arith.constant 0 : index
    %64 = vector.load %arg2[%c256, %c0_34] : memref<384x128xbf16, #tpu.memory_space<vmem>>, vector<128x128xbf16>
    %65 = arith.truncf %60 : vector<24x64xf32> to vector<24x64xbf16>
    %cst_35 = arith.constant dense<0.000000e+00> : vector<24x128xf32>
    %66 = tpu.matmul %65, %61, %cst_35 {dimension_numbers = #tpu.dot_dimension_numbers<[1], [0], [0], [1], [0, 0, 1, 1], [], []>} : vector<24x64xbf16>, vector<64x128xbf16>, vector<24x128xf32> -> vector<24x128xf32>
    %cst_36 = arith.constant 0.000000e+00 : f32
    %67 = vector.broadcast %cst_36 : f32 to vector<24x128xf32>
    %68 = arith.maximumf %66, %67 : vector<24x128xf32>
    %cst_37 = arith.constant dense<0.000000e+00> : vector<24x128xf32>
    %69 = tpu.matmul %65, %62, %cst_37 {dimension_numbers = #tpu.dot_dimension_numbers<[1], [0], [0], [1], [0, 0, 1, 1], [], []>} : vector<24x64xbf16>, vector<64x128xbf16>, vector<24x128xf32> -> vector<24x128xf32>
    %70 = arith.truncf %68 : vector<24x128xf32> to vector<24x128xbf16>
    %cst_38 = arith.constant dense<0.000000e+00> : vector<24x128xf32>
    %71 = tpu.matmul %70, %63, %cst_38 {dimension_numbers = #tpu.dot_dimension_numbers<[1], [0], [0], [1], [0, 0, 1, 1], [], []>} : vector<24x128xbf16>, vector<128x128xbf16>, vector<24x128xf32> -> vector<24x128xf32>
    %cst_39 = arith.constant 0.000000e+00 : f32
    %72 = vector.broadcast %cst_39 : f32 to vector<24x128xf32>
    %73 = arith.maximumf %71, %72 : vector<24x128xf32>
    %74 = arith.truncf %73 : vector<24x128xf32> to vector<24x128xbf16>
    %cst_40 = arith.constant dense<0.000000e+00> : vector<24x128xf32>
    %75 = tpu.matmul %74, %64, %cst_40 {dimension_numbers = #tpu.dot_dimension_numbers<[1], [0], [0], [1], [0, 0, 1, 1], [], []>} : vector<24x128xbf16>, vector<128x128xbf16>, vector<24x128xf32> -> vector<24x128xf32>
    %cst_41 = arith.constant 0.000000e+00 : f32
    %76 = vector.broadcast %cst_41 : f32 to vector<24x128xf32>
    %77 = arith.maximumf %75, %76 : vector<24x128xf32>
    %78 = arith.addf %77, %69 : vector<24x128xf32>
    %79 = vector.extract_strided_slice %78 {offsets = [0, 0], sizes = [16, 64], strides = [1, 1]} : vector<24x128xf32> to vector<16x64xf32>
    %80 = vector.extract_strided_slice %78 {offsets = [16, 64], sizes = [2, 64], strides = [1, 1]} : vector<24x128xf32> to vector<2x64xf32>
    %81 = arith.truncf %79 : vector<16x64xf32> to vector<16x64xbf16>
    %82 = arith.truncf %80 : vector<2x64xf32> to vector<2x64xbf16>
    %cst_42 = arith.constant dense<0.000000e+00> : vector<16x2xf32>
    %83 = tpu.matmul %81, %82, %cst_42 {dimension_numbers = #tpu.dot_dimension_numbers<[1], [1], [0], [0], [0, 0, 1, 0], [], []>} : vector<16x64xbf16>, vector<2x64xbf16>, vector<16x2xf32> -> vector<16x2xf32>
    %c56 = arith.constant 56 : index
    %c0_43 = arith.constant 0 : index
    %84 = vector.load %arg0[%c56, %c0_43] : memref<72x128xbf16, #tpu.memory_space<vmem>>, vector<16x2xbf16>
    %85 = arith.extf %84 : vector<16x2xbf16> to vector<16x2xf32>
    %cst_44 = arith.constant 1.000000e+00 : f32
    %86 = vector.broadcast %cst_44 : f32 to vector<16x2xf32>
    %87 = arith.subf %86, %85 : vector<16x2xf32>
    %cst_45 = arith.constant 0.000000e+00 : f32
    %88 = vector.broadcast %cst_45 : f32 to vector<16x2xf32>
    %89 = arith.subf %88, %83 : vector<16x2xf32>
    %cst_46 = arith.constant 0.000000e+00 : f32
    %90 = vector.broadcast %cst_46 : f32 to vector<16x2xf32>
    %91 = arith.maximumf %89, %90 : vector<16x2xf32>
    %92 = math.absf %89 : vector<16x2xf32>
    %cst_47 = arith.constant 0.000000e+00 : f32
    %93 = vector.broadcast %cst_47 : f32 to vector<16x2xf32>
    %94 = arith.subf %93, %92 : vector<16x2xf32>
    %95 = math.exp %94 : vector<16x2xf32>
    %96 = math.log1p %95 : vector<16x2xf32>
    %97 = arith.addf %91, %96 : vector<16x2xf32>
    %cst_48 = arith.constant 0.693147182 : f32
    %98 = vector.broadcast %cst_48 : f32 to vector<16x2xf32>
    %99 = arith.subf %98, %97 : vector<16x2xf32>
    %100 = arith.mulf %85, %99 : vector<16x2xf32>
    %101 = vector.shape_cast %100 : vector<16x2xf32> to vector<1x16x2xf32>
    %cst_49 = arith.constant dense<0.000000e+00> : vector<1xf32>
    %102 = vector.multi_reduction <add>, %101, %cst_49 [1, 2] : vector<1x16x2xf32> to vector<1xf32>
    %103 = vector.shape_cast %102 : vector<1xf32> to vector<1x1x1xf32>
    %104 = vector.extract %103[0, 0, 0] : f32 from vector<1x1x1xf32>
    %105 = arith.addf %97, %83 : vector<16x2xf32>
    %cst_50 = arith.constant 0.693147182 : f32
    %106 = vector.broadcast %cst_50 : f32 to vector<16x2xf32>
    %107 = arith.subf %105, %106 : vector<16x2xf32>
    %108 = arith.mulf %87, %107 : vector<16x2xf32>
    %109 = vector.shape_cast %108 : vector<16x2xf32> to vector<1x16x2xf32>
    %cst_51 = arith.constant dense<0.000000e+00> : vector<1xf32>
    %110 = vector.multi_reduction <add>, %109, %cst_51 [1, 2] : vector<1x16x2xf32> to vector<1xf32>
    %111 = vector.shape_cast %110 : vector<1xf32> to vector<1x1x1xf32>
    %112 = vector.extract %111[0, 0, 0] : f32 from vector<1x1x1xf32>
    %cst_52 = arith.constant 1.600000e+01 : f32
    %113 = arith.divf %112, %cst_52 : f32
    %cst_53 = arith.constant 1.600000e+01 : f32
    %114 = arith.divf %104, %cst_53 : f32
    %115 = arith.subf %113, %114 : f32
    %c0_54 = arith.constant 0 : index
    %c0_55 = arith.constant 0 : index
    %116 = memref.load %arg3[%c0_54, %c0_55] : memref<1x1xf32, #tpu.memory_space<smem>>
    memref.store %115, %arg3[%c0_54, %c0_55] : memref<1x1xf32, #tpu.memory_space<smem>>
    return
  }
}

</mosaic_0001>

<llo_original>
// kernel: tpu_custom_call.1
$region0: #{tpu_custom_call.1}
  #allocation0 [shape = 'u32[]', space=smem, size = 0x4, offset = 0x4, fixed_abs, tag = 'smem constant byte address 0x4 - core index']
  #allocation1 [shape = 'u32[144,128]{1,0:T(1,128)}', space=vmem, size = 0x12000, scoped, tag = 'internal scratch']
  %s0 = inlined_call_operand.hbm [shape: bf16[72,128], index: 0, kind: input, shape index: {}]
  %s1 = inlined_call_operand.hbm [shape: bf16[128,128], index: 1, kind: input, shape index: {}]
  %s2 = inlined_call_operand.hbm [shape: bf16[384,128], index: 2, kind: input, shape index: {}]
  %s3 = inlined_call_operand.hbm [shape: f32[1,1], index: 3, kind: output, shape index: {}]
  %s4 = sld [smem:[#allocation0]]
  $region34: #{tpu_custom_call.1} parent=0
    _
  %s6 = ssub.s32 1, %s4
  %s7 = scalar_select 0, %s6, %s4
  $region1: #{tpu_custom_call.1} parent=0
    #allocation2 [shape = 'u8[18432]{0}', space=vmem, size = 0x4800, scoped, tag = 'input window, operand 0, single buffered']
    #allocation3 [shape = 's32[1]{0}', space=sflag, size = 0x4, scoped, tag = 'scoped memory for tpu_custom_call.1']
    #allocation4 [shape = 's32[1]{0}', space=sflag, size = 0x4, scoped, tag = 'scoped memory for tpu_custom_call.1']
    #allocation5 [shape = 'u8[32768]{0}', space=vmem, size = 0x8000, scoped, tag = 'input window, operand 1, single buffered']
    #allocation6 [shape = 's32[1]{0}', space=sflag, size = 0x4, scoped, tag = 'scoped memory for tpu_custom_call.1']
    #allocation7 [shape = 'u8[98304]{0}', space=vmem, size = 0x18000, scoped, tag = 'input window, operand 2, single buffered']
    #allocation8 [shape = 'u8[512]{0}', space=smem, size = 0x200, scoped, tag = 'output window, operand 0, single buffered']
    %8 = vsyncpa [#allocation3], 0
    %9 = vsyncpa [#allocation6], 0
    %10 = vsyncpa [#allocation4], 0
    // Predicated region
    $region2: #{tpu_custom_call.1} parent=1 // pred_check
      _
    $region3: #{tpu_custom_call.1} parent=1 // pred_check_branch
      %12 = sbr.rel (0) target = $region5
    $region4: #{tpu_custom_call.1} parent=1 // pred_region
      %s14 = ssub.s32 576, 576
      %15 = vsyncadd [#allocation3], %s14
      %s16 = sshll.u32 [#allocation2], 4
      %s17 = int_to_ptr.vmem [resolvable:$true] %s16
      %22 = dma.hbm_to_vmem [thread:$0]  %s0, 576, %s17, [#allocation3], 64, 64, 4
    $region5: #{tpu_custom_call.1} parent=1 // pred_fallthru
      _
    // Predicated region
    $region6: #{tpu_custom_call.1} parent=1 // pred_check
      _
    $region7: #{tpu_custom_call.1} parent=1 // pred_check_branch
      %24 = sbr.rel (0) target = $region9
    $region8: #{tpu_custom_call.1} parent=1 // pred_region
      %s26 = ssub.s32 1024, 1024
      %27 = vsyncadd [#allocation6], %s26
      %s28 = sshll.u32 [#allocation5], 4
      %s29 = int_to_ptr.vmem [resolvable:$true] %s28
      %34 = dma.hbm_to_vmem [thread:$0]  %s1, 1024, %s29, [#allocation6], 64, 64, 4
    $region9: #{tpu_custom_call.1} parent=1 // pred_fallthru
      _
    // Predicated region
    $region10: #{tpu_custom_call.1} parent=1 // pred_check
      _
    $region11: #{tpu_custom_call.1} parent=1 // pred_check_branch
      %36 = sbr.rel (0) target = $region13
    $region12: #{tpu_custom_call.1} parent=1 // pred_region
      %s38 = ssub.s32 3072, 3072
      %39 = vsyncadd [#allocation6], %s38
      %s40 = sshll.u32 [#allocation7], 4
      %s41 = int_to_ptr.vmem [resolvable:$true] %s40
      %46 = dma.hbm_to_vmem [thread:$0]  %s2, 3072, %s41, [#allocation6], 64, 64, 4
    $region13: #{tpu_custom_call.1} parent=1 // pred_fallthru
      _
    // Predicated region
    $region14: #{tpu_custom_call.1} parent=1 // pred_check
      _
    $region15: #{tpu_custom_call.1} parent=1 // pred_check_branch
      %48 = sbr.rel (0) target = $region17
    $region16: #{tpu_custom_call.1} parent=1 // pred_region
      %49 = dma.done [#allocation3], 576
    $region17: #{tpu_custom_call.1} parent=1 // pred_fallthru
      _
    // Predicated region
    $region18: #{tpu_custom_call.1} parent=1 // pred_check
      _
    $region19: #{tpu_custom_call.1} parent=1 // pred_check_branch
      %51 = sbr.rel (0) target = $region21
    $region20: #{tpu_custom_call.1} parent=1 // pred_region
      %52 = dma.done [#allocation6], 1024
    $region21: #{tpu_custom_call.1} parent=1 // pred_fallthru
      _
    // Predicated region
    $region22: #{tpu_custom_call.1} parent=1 // pred_check
      _
    $region23: #{tpu_custom_call.1} parent=1 // pred_check_branch
      %54 = sbr.rel (0) target = $region25
    $region24: #{tpu_custom_call.1} parent=1 // pred_region
      %55 = dma.done [#allocation6], 3072
    $region25: #{tpu_custom_call.1} parent=1 // pred_fallthru
      _
    %v57 = vld [vmem:[#allocation2 + $0x8] sm:$0xf]
    %v58 = vld [vmem:[#allocation2 + $0xc] sm:$0xf]
    %v59 = vld [vmem:[#allocation2] sm:$0xf]
    %v60 = vld [vmem:[#allocation2 + $0x4] sm:$0xf]
    %v61 = vld [vmem:[#allocation5] sm:$0xf]
    %v62 = vld [vmem:[#allocation5 + $0x4] sm:$0xf]
    %v63 = vld [vmem:[#allocation5 + $0x8] sm:$0xf]
    %v64 = vld [vmem:[#allocation5 + $0xc] sm:$0xf]
    %v65 = vld [vmem:[#allocation5 + $0x10] sm:$0xf]
    %v66 = vld [vmem:[#allocation5 + $0x14] sm:$0xf]
    %v67 = vld [vmem:[#allocation5 + $0x18] sm:$0xf]
    %v68 = vld [vmem:[#allocation5 + $0x1c] sm:$0xf]
    %v69 = vld [vmem:[#allocation5 + $0x20] sm:$0xf]
    %v70 = vld [vmem:[#allocation5 + $0x24] sm:$0xf]
    %v71 = vld [vmem:[#allocation5 + $0x28] sm:$0xf]
    %v72 = vld [vmem:[#allocation5 + $0x2c] sm:$0xf]
    %v73 = vld [vmem:[#allocation5 + $0x30] sm:$0xf]
    %v74 = vld [vmem:[#allocation5 + $0x34] sm:$0xf]
    %v75 = vld [vmem:[#allocation5 + $0x38] sm:$0xf]
    %v76 = vld [vmem:[#allocation5 + $0x3c] sm:$0xf]
    %v77 = vld [vmem:[#allocation5] sm:$0xf]
    %v78 = vld [vmem:[#allocation5 + $0x4] sm:$0xf]
    %v79 = vld [vmem:[#allocation5 + $0x8] sm:$0xf]
    %v80 = vld [vmem:[#allocation5 + $0xc] sm:$0xf]
    %v83 = vunpack.c.l.b16 %v57
    %v84 = vunpack.c.l.b16 %v58
    %v85 = vpack.c.b16 %v84, %v83
    %v88 = vunpack.c.l.b16 %v59
    %v89 = vunpack.c.l.b16 %v60
    %v90 = vpack.c.b16 %v89, %v88
    %vm92 = vcmask 130048
    %v94 = vsel %vm92, %v85, 0
    %96 = vmatprep.subr.bf16.mxu0 0
    %97 = vmatpush1.bf16.msra.mxu0 0
    %98 = vmatprep.subr.bf16.mxu0 0
    %99 = vmatpush1.bf16.msra.mxu0 0
    %100 = vmatprep.subr.bf16.mxu0 0
    %101 = vmatpush1.bf16.msra.mxu0 0
    %102 = vmatprep.subr.bf16.mxu0 0
    %103 = vmatpush1.bf16.msra.mxu0 0
    %104 = vmatprep.subr.bf16.mxu0 0
    %105 = vmatpush1.bf16.msra.mxu0 0
    %106 = vmatprep.subr.bf16.mxu0 0
    %107 = vmatpush1.bf16.msra.mxu0 0
    %108 = vmatprep.subr.bf16.mxu0 0
    %109 = vmatpush1.bf16.msra.mxu0 0
    %110 = vmatprep.subr.bf16.mxu0 0
    %111 = vmatpush1.bf16.msra.mxu0 %v90
    %112 = vmatprep.subr.bf16.mxu0 0
    %113 = vmatpush2.bf16.msra.mxu0 0
    %114 = vmatprep.subr.bf16.mxu0 0
    %115 = vmatpush2.bf16.msra.mxu0 0
    %116 = vmatprep.subr.bf16.mxu0 0
    %117 = vmatpush2.bf16.msra.mxu0 0
    %118 = vmatprep.subr.bf16.mxu0 0
    %119 = vmatpush2.bf16.msra.mxu0 0
    %120 = vmatprep.subr.bf16.mxu0 0
    %121 = vmatpush2.bf16.msra.mxu0 0
    %122 = vmatprep.subr.bf16.mxu0 0
    %123 = vmatpush2.bf16.msra.mxu0 0
    %124 = vmatprep.subr.bf16.mxu0 0
    %125 = vmatpush2.bf16.msra.mxu0 0
    %126 = vmatprep.subr.bf16.mxu0 0
    %127 = vmatpush2.bf16.msra.mxu0 0
    %128 = vmatprep.mubr.bf16.mxu0 0
    %129 = vmatmul.mubr.bf16.gmra.mxu0 %v94
    %v130 = vpop.f32.mrf.mxu0
    %v131 = vadd.f32 0.0, %v130
    %v132 = vpop.f32.mrf.mxu0
    %v133 = vpop.f32.mrf.mxu0
    %v134 = vadd.f32 0.0, %v133
    %v135 = vpop.f32.mrf.mxu0
    %136 = vdwg.mxu0
    %v137 = vpack.c.bf16 %v134, %v131
    %v154 = vunpack.c.l.b16 %v61
    %v155 = vunpack.c.l.b16 %v62
    %v156 = vunpack.c.l.b16 %v63
    %v157 = vunpack.c.l.b16 %v64
    %v158 = vunpack.c.l.b16 %v65
    %v159 = vunpack.c.l.b16 %v66
    %v160 = vunpack.c.l.b16 %v67
    %v161 = vunpack.c.l.b16 %v68
    %v162 = vunpack.c.l.b16 %v69
    %v163 = vunpack.c.l.b16 %v70
    %v164 = vunpack.c.l.b16 %v71
    %v165 = vunpack.c.l.b16 %v72
    %v166 = vunpack.c.l.b16 %v73
    %v167 = vunpack.c.l.b16 %v74
    %v168 = vunpack.c.l.b16 %v75
    %v169 = vunpack.c.l.b16 %v76
    %v170 = vpack.c.b16 %v155, %v154
    %v171 = vpack.c.b16 %v157, %v156
    %v172 = vpack.c.b16 %v159, %v158
    %v173 = vpack.c.b16 %v161, %v160
    %v174 = vpack.c.b16 %v163, %v162
    %v175 = vpack.c.b16 %v165, %v164
    %v176 = vpack.c.b16 %v167, %v166
    %v177 = vpack.c.b16 %v169, %v168
    %186 = vmatprep.subr.bf16.mxu0 0
    %187 = vmatpush1.bf16.msra.mxu0 %v177
    %188 = vmatprep.subr.bf16.mxu0 0
    %189 = vmatpush1.bf16.msra.mxu0 %v176
    %190 = vmatprep.subr.bf16.mxu0 0
    %191 = vmatpush1.bf16.msra.mxu0 %v175
    %192 = vmatprep.subr.bf16.mxu0 0
    %193 = vmatpush1.bf16.msra.mxu0 %v174
    %194 = vmatprep.subr.bf16.mxu0 0
    %195 = vmatpush1.bf16.msra.mxu0 %v173
    %196 = vmatprep.subr.bf16.mxu0 0
    %197 = vmatpush1.bf16.msra.mxu0 %v172
    %198 = vmatprep.subr.bf16.mxu0 0
    %199 = vmatpush1.bf16.msra.mxu0 %v171
    %200 = vmatprep.subr.bf16.mxu0 0
    %201 = vmatpush1.bf16.msra.mxu0 %v170
    %202 = vmatprep.subr.bf16.mxu0 0
    %203 = vmatpush2.bf16.msra.mxu0 0
    %204 = vmatprep.subr.bf16.mxu0 0
    %205 = vmatpush2.bf16.msra.mxu0 0
    %206 = vmatprep.subr.bf16.mxu0 0
    %207 = vmatpush2.bf16.msra.mxu0 0
    %208 = vmatprep.subr.bf16.mxu0 0
    %209 = vmatpush2.bf16.msra.mxu0 0
    %210 = vmatprep.subr.bf16.mxu0 0
    %211 = vmatpush2.bf16.msra.mxu0 0
    %212 = vmatprep.subr.bf16.mxu0 0
    %213 = vmatpush2.bf16.msra.mxu0 0
    %214 = vmatprep.subr.bf16.mxu0 0
    %215 = vmatpush2.bf16.msra.mxu0 0
    %216 = vmatprep.subr.bf16.mxu0 0
    %217 = vmatpush2.bf16.msra.mxu0 0
    %218 = vmatprep.mubr.bf16.mxu0 0
    %219 = vmatmul.mubr.bf16.gmra.mxu0 %v137
    %v220 = vpop.f32.mrf.mxu0
    %v221 = vadd.f32 0.0, %v220
    %v222 = vpop.f32.mrf.mxu0
    %v223 = vpop.f32.mrf.mxu0
    %v224 = vadd.f32 0.0, %v223
    %v225 = vpop.f32.mrf.mxu0
    %226 = vdwg.mxu0
    %v227 = vmax.f32 %v221, 0.0
    %v228 = vmax.f32 %v224, 0.0
    %v229 = vpack.c.bf16 %v228, %v227
    %v234 = vunpack.c.l.b16 %v77
    %v235 = vunpack.c.l.b16 %v78
    %v236 = vunpack.c.l.b16 %v79
    %v237 = vunpack.c.l.b16 %v80
    %v238 = vpack.c.b16 %v235, %v234
    %v239 = vpack.c.b16 %v237, %v236
    %240 = vrot.lane.b32.xlu0 %v238, 96
    %v241 = vpop.permute.xlu0 %240
    %242 = vrot.lane.b32.xlu0 %v239, 96
    %v243 = vpop.permute.xlu0 %242
    %vm246 = vcmask 261120
    %v248 = vsel %vm246, %v229, 0
    %250 = vmatprep.subr.bf16.mxu0 0
    %251 = vmatpush1.bf16.msra.mxu0 0
    %252 = vmatprep.subr.bf16.mxu0 0
    %253 = vmatpush1.bf16.msra.mxu0 0
    %254 = vmatprep.subr.bf16.mxu0 0
    %255 = vmatpush1.bf16.msra.mxu0 0
    %256 = vmatprep.subr.bf16.mxu0 0
    %257 = vmatpush1.bf16.msra.mxu0 0
    %258 = vmatprep.subr.bf16.mxu0 0
    %259 = vmatpush1.bf16.msra.mxu0 0
    %260 = vmatprep.subr.bf16.mxu0 0
    %261 = vmatpush1.bf16.msra.mxu0 0
    %262 = vmatprep.subr.bf16.mxu0 0
    %263 = vmatpush1.bf16.msra.mxu0 %v243
    %264 = vmatprep.subr.bf16.mxu0 0
    %265 = vmatpush1.bf16.msra.mxu0 %v241
    %266 = vmatprep.subr.bf16.mxu0 0
    %267 = vmatpush2.bf16.msra.mxu0 0
    %268 = vmatprep.subr.bf16.mxu0 0
    %269 = vmatpush2.bf16.msra.mxu0 0
    %270 = vmatprep.subr.bf16.mxu0 0
    %271 = vmatpush2.bf16.msra.mxu0 0
    %272 = vmatprep.subr.bf16.mxu0 0
    %273 = vmatpush2.bf16.msra.mxu0 0
    %274 = vmatprep.subr.bf16.mxu0 0
    %275 = vmatpush2.bf16.msra.mxu0 0
    %276 = vmatprep.subr.bf16.mxu0 0
    %277 = vmatpush2.bf16.msra.mxu0 0
    %278 = vmatprep.subr.bf16.mxu0 0
    %279 = vmatpush2.bf16.msra.mxu0 0
    %280 = vmatprep.subr.bf16.mxu0 0
    %281 = vmatpush2.bf16.msra.mxu0 0
    %282 = vmatprep.mubr.bf16.mxu0 0
    %283 = vmatmul.mubr.bf16.gmra.mxu0 %v248
    %v284 = vpop.f32.mrf.mxu0
    %v285 = vadd.f32 0.0, %v284
    %v286 = vpop.f32.mrf.mxu0
    %v287 = vpop.f32.mrf.mxu0
    %v288 = vadd.f32 0.0, %v287
    %v289 = vpop.f32.mrf.mxu0
    %290 = vdwg.mxu0
    %v291 = vmax.f32 %v285, 0.0
    %v292 = vmax.f32 %v288, 0.0
    %v293 = vsel %vm246, %v291, 0.0
    %v294 = vsel %vm246, %v292, 0.0
    %v295 = vadd.f32 %v293, %v294
    %v296 = vrot.slane %v295, 4
    %v297 = vadd.f32 %v295, %v296
    %v298 = vrot.slane %v297, 2
    %v299 = vadd.f32 %v297, %v298
    %v300 = vrot.slane %v299, 1
    %v301 = vadd.f32 %v299, %v300
    %v302 = vrcp.pop 16.0
    %v303 = vmul.f32 %v301, %v302
    %v304 = vsub.f32 %v291, %v303
    %v305 = vsub.f32 %v292, %v303
    %v306 = vmul.f32 %v304, %v304
    %v307 = vmul.f32 %v305, %v305
    %v308 = vsel %vm246, %v306, 0.0
    %v309 = vsel %vm246, %v307, 0.0
    %v310 = vadd.f32 %v308, %v309
    %v311 = vrot.slane %v310, 4
    %v312 = vadd.f32 %v310, %v311
    %v313 = vrot.slane %v312, 2
    %v314 = vadd.f32 %v312, %v313
    %v315 = vrot.slane %v314, 1
    %v316 = vadd.f32 %v314, %v315
    %v317 = vmul.f32 %v316, %v302
    %v318 = vadd.f32 %v317, 1e-05
    %v319 = vrsqrt.pop %v318
    %v320 = vmul.f32 %v304, %v319
    %v321 = vmul.f32 %v305, %v319
    %v322 = vpack.c.bf16 %v321, %v320
    %323 = vmatprep.subr.bf16.mxu0 0
    %324 = vmatpush1.bf16.msra.mxu0 0
    %325 = vmatprep.subr.bf16.mxu0 0
    %326 = vmatpush1.bf16.msra.mxu0 0
    %327 = vmatprep.subr.bf16.mxu0 0
    %328 = vmatpush1.bf16.msra.mxu0 0
    %329 = vmatprep.subr.bf16.mxu0 0
    %330 = vmatpush1.bf16.msra.mxu0 0
    %331 = vmatprep.subr.bf16.mxu0 0
    %332 = vmatpush1.bf16.msra.mxu0 0
    %333 = vmatprep.subr.bf16.mxu0 0
    %334 = vmatpush1.bf16.msra.mxu0 0
    %335 = vmatprep.subr.bf16.mxu0 0
    %336 = vmatpush1.bf16.msra.mxu0 0
    %337 = vmatprep.subr.bf16.mxu0 0
    %338 = vmatpush1.bf16.msra.mxu0 %v322
    %339 = vmatprep.subr.bf16.mxu0 0
    %340 = vmatpush2.bf16.msra.mxu0 0
    %341 = vmatprep.subr.bf16.mxu0 0
    %342 = vmatpush2.bf16.msra.mxu0 0
    %343 = vmatprep.subr.bf16.mxu0 0
    %344 = vmatpush2.bf16.msra.mxu0 0
    %345 = vmatprep.subr.bf16.mxu0 0
    %346 = vmatpush2.bf16.msra.mxu0 0
    %347 = vmatprep.subr.bf16.mxu0 0
    %348 = vmatpush2.bf16.msra.mxu0 0
    %349 = vmatprep.subr.bf16.mxu0 0
    %350 = vmatpush2.bf16.msra.mxu0 0
    %351 = vmatprep.subr.bf16.mxu0 0
    %352 = vmatpush2.bf16.msra.mxu0 0
    %353 = vmatprep.subr.bf16.mxu0 0
    %354 = vmatpush2.bf16.msra.mxu0 0
    %355 = vmatprep.mubr.bf16.mxu0 0
    %356 = vmatmul.mubr.bf16.gmra.mxu0 %v94
    %v357 = vpop.f32.mrf.mxu0
    %v358 = vadd.f32 0.0, %v357
    %v359 = vpop.f32.mrf.mxu0
    %v360 = vpop.f32.mrf.mxu0
    %v361 = vadd.f32 0.0, %v360
    %v362 = vpop.f32.mrf.mxu0
    %363 = vdwg.mxu0
    %v364 = vpack.c.bf16 %v361, %v358
    %365 = vrot.lane.b32.xlu0 %v238, 64
    %v366 = vpop.permute.xlu0 %365
    %367 = vrot.lane.b32.xlu0 %v239, 64
    %v368 = vpop.permute.xlu0 %367
    %v372 = vsel %vm246, %v364, 0
    %374 = vmatprep.subr.bf16.mxu0 0
    %375 = vmatpush1.bf16.msra.mxu0 0
    %376 = vmatprep.subr.bf16.mxu0 0
    %377 = vmatpush1.bf16.msra.mxu0 0
    %378 = vmatprep.subr.bf16.mxu0 0
    %379 = vmatpush1.bf16.msra.mxu0 0
    %380 = vmatprep.subr.bf16.mxu0 0
    %381 = vmatpush1.bf16.msra.mxu0 0
    %382 = vmatprep.subr.bf16.mxu0 0
    %383 = vmatpush1.bf16.msra.mxu0 0
    %384 = vmatprep.subr.bf16.mxu0 0
    %385 = vmatpush1.bf16.msra.mxu0 0
    %386 = vmatprep.subr.bf16.mxu0 0
    %387 = vmatpush1.bf16.msra.mxu0 %v368
    %388 = vmatprep.subr.bf16.mxu0 0
    %389 = vmatpush1.bf16.msra.mxu0 %v366
    %390 = vmatprep.subr.bf16.mxu0 0
    %391 = vmatpush2.bf16.msra.mxu0 0
    %392 = vmatprep.subr.bf16.mxu0 0
    %393 = vmatpush2.bf16.msra.mxu0 0
    %394 = vmatprep.subr.bf16.mxu0 0
    %395 = vmatpush2.bf16.msra.mxu0 0
    %396 = vmatprep.subr.bf16.mxu0 0
    %397 = vmatpush2.bf16.msra.mxu0 0
    %398 = vmatprep.subr.bf16.mxu0 0
    %399 = vmatpush2.bf16.msra.mxu0 0
    %400 = vmatprep.subr.bf16.mxu0 0
    %401 = vmatpush2.bf16.msra.mxu0 0
    %402 = vmatprep.subr.bf16.mxu0 0
    %403 = vmatpush2.bf16.msra.mxu0 0
    %404 = vmatprep.subr.bf16.mxu0 0
    %405 = vmatpush2.bf16.msra.mxu0 0
    %406 = vmatprep.mubr.bf16.mxu0 0
    %407 = vmatmul.mubr.bf16.gmra.mxu0 %v372
    %v408 = vpop.f32.mrf.mxu0
    %v409 = vadd.f32 0.0, %v408
    %v410 = vpop.f32.mrf.mxu0
    %v411 = vpop.f32.mrf.mxu0
    %v412 = vadd.f32 0.0, %v411
    %v413 = vpop.f32.mrf.mxu0
    %414 = vdwg.mxu0
    %v415 = vmax.f32 %v409, 0.0
    %v416 = vmax.f32 %v412, 0.0
    %v417 = vpack.c.bf16 %v416, %v415
    %418 = vrot.lane.b32.xlu0 %v238, 32
    %v419 = vpop.permute.xlu0 %418
    %420 = vrot.lane.b32.xlu0 %v239, 32
    %v421 = vpop.permute.xlu0 %420
    %v425 = vsel %vm246, %v417, 0
    %427 = vmatprep.subr.bf16.mxu0 0
    %428 = vmatpush1.bf16.msra.mxu0 0
    %429 = vmatprep.subr.bf16.mxu0 0
    %430 = vmatpush1.bf16.msra.mxu0 0
    %431 = vmatprep.subr.bf16.mxu0 0
    %432 = vmatpush1.bf16.msra.mxu0 0
    %433 = vmatprep.subr.bf16.mxu0 0
    %434 = vmatpush1.bf16.msra.mxu0 0
    %435 = vmatprep.subr.bf16.mxu0 0
    %436 = vmatpush1.bf16.msra.mxu0 0
    %437 = vmatprep.subr.bf16.mxu0 0
    %438 = vmatpush1.bf16.msra.mxu0 0
    %439 = vmatprep.subr.bf16.mxu0 0
    %440 = vmatpush1.bf16.msra.mxu0 %v421
    %441 = vmatprep.subr.bf16.mxu0 0
    %442 = vmatpush1.bf16.msra.mxu0 %v419
    %443 = vmatprep.subr.bf16.mxu0 0
    %444 = vmatpush2.bf16.msra.mxu0 0
    %445 = vmatprep.subr.bf16.mxu0 0
    %446 = vmatpush2.bf16.msra.mxu0 0
    %447 = vmatprep.subr.bf16.mxu0 0
    %448 = vmatpush2.bf16.msra.mxu0 0
    %449 = vmatprep.subr.bf16.mxu0 0
    %450 = vmatpush2.bf16.msra.mxu0 0
    %451 = vmatprep.subr.bf16.mxu0 0
    %452 = vmatpush2.bf16.msra.mxu0 0
    %453 = vmatprep.subr.bf16.mxu0 0
    %454 = vmatpush2.bf16.msra.mxu0 0
    %455 = vmatprep.subr.bf16.mxu0 0
    %456 = vmatpush2.bf16.msra.mxu0 0
    %457 = vmatprep.subr.bf16.mxu0 0
    %458 = vmatpush2.bf16.msra.mxu0 0
    %459 = vmatprep.mubr.bf16.mxu0 0
    %460 = vmatmul.mubr.bf16.gmra.mxu0 %v425
    %v461 = vpop.f32.mrf.mxu0
    %v462 = vadd.f32 0.0, %v461
    %v463 = vpop.f32.mrf.mxu0
    %v464 = vpop.f32.mrf.mxu0
    %v465 = vadd.f32 0.0, %v464
    %v466 = vpop.f32.mrf.mxu0
    %467 = vdwg.mxu0
    %v468 = vmax.f32 %v462, 0.0
    %v469 = vmax.f32 %v465, 0.0
    %v470 = vsel %vm246, %v468, 0.0
    %v471 = vsel %vm246, %v469, 0.0
    %v472 = vadd.f32 %v470, %v471
    %v473 = vrot.slane %v472, 4
    %v474 = vadd.f32 %v472, %v473
    %v475 = vrot.slane %v474, 2
    %v476 = vadd.f32 %v474, %v475
    %v477 = vrot.slane %v476, 1
    %v478 = vadd.f32 %v476, %v477
    %v479 = vmul.f32 %v478, %v302
    %v480 = vsub.f32 %v468, %v479
    %v481 = vsub.f32 %v469, %v479
    %v482 = vmul.f32 %v480, %v480
    %v483 = vmul.f32 %v481, %v481
    %v484 = vsel %vm246, %v482, 0.0
    %v485 = vsel %vm246, %v483, 0.0
    %v486 = vadd.f32 %v484, %v485
    %v487 = vrot.slane %v486, 4
    %v488 = vadd.f32 %v486, %v487
    %v489 = vrot.slane %v488, 2
    %v490 = vadd.f32 %v488, %v489
    %v491 = vrot.slane %v490, 1
    %v492 = vadd.f32 %v490, %v491
    %v493 = vmul.f32 %v492, %v302
    %v494 = vadd.f32 %v493, 1e-05
    %v495 = vrsqrt.pop %v494
    %v496 = vmul.f32 %v480, %v495
    %v497 = vmul.f32 %v481, %v495
    %500 = vrot.lane.b32.xlu0 %v496, 32
    %v501 = vpop.permute.xlu0 %500
    %502 = vrot.lane.b32.xlu0 %v497, 32
    %v503 = vpop.permute.xlu0 %502
    %v506 = vsel %vm246, %v320, %v501
    %v507 = vsel %vm246, %v321, %v503
    %v508 = vld [vmem:[#allocation2 + $0x10] sm:$0xf]
    %v509 = vld [vmem:[#allocation2 + $0x14] sm:$0xf]
    %v510 = vld [vmem:[#allocation2 + $0x18] sm:$0xf]
    %v511 = vpack.c.bf16 %v507, %v506
    %v515 = vunpack.c.l.b16 %v508
    %v516 = vunpack.c.l.b16 %v509
    %v517 = vunpack.c.l.b16 %v510
    %v518 = vpack.c.b16 %v516, %v515
    %v519 = vpack.c.b16 %v517, %v517
    %v521 = vsel %vm92, %v518, 0
    %v524 = vsel %vm92, %v519, 0
    %526 = vmatprep.subr.bf16.mxu0 0
    %527 = vmatpush1.bf16.msra.mxu0 0
    %528 = vmatprep.subr.bf16.mxu0 0
    %529 = vmatpush1.bf16.msra.mxu0 0
    %530 = vmatprep.subr.bf16.mxu0 0
    %531 = vmatpush1.bf16.msra.mxu0 0
    %532 = vmatprep.subr.bf16.mxu0 0
    %533 = vmatpush1.bf16.msra.mxu0 0
    %534 = vmatprep.subr.bf16.mxu0 0
    %535 = vmatpush1.bf16.msra.mxu0 0
    %536 = vmatprep.subr.bf16.mxu0 0
    %537 = vmatpush1.bf16.msra.mxu0 0
    %538 = vmatprep.subr.bf16.mxu0 0
    %539 = vmatpush1.bf16.msra.mxu0 0
    %540 = vmatprep.subr.bf16.mxu0 0
    %541 = vmatpush1.bf16.msra.mxu0 %v511
    %542 = vmatprep.subr.bf16.mxu0 0
    %543 = vmatpush2.bf16.msra.mxu0 0
    %544 = vmatprep.subr.bf16.mxu0 0
    %545 = vmatpush2.bf16.msra.mxu0 0
    %546 = vmatprep.subr.bf16.mxu0 0
    %547 = vmatpush2.bf16.msra.mxu0 0
    %548 = vmatprep.subr.bf16.mxu0 0
    %549 = vmatpush2.bf16.msra.mxu0 0
    %550 = vmatprep.subr.bf16.mxu0 0
    %551 = vmatpush2.bf16.msra.mxu0 0
    %552 = vmatprep.subr.bf16.mxu0 0
    %553 = vmatpush2.bf16.msra.mxu0 0
    %554 = vmatprep.subr.bf16.mxu0 0
    %555 = vmatpush2.bf16.msra.mxu0 0
    %556 = vmatprep.subr.bf16.mxu0 0
    %557 = vmatpush2.bf16.msra.mxu0 0
    %558 = vmatprep.mubr.bf16.mxu0 0
    %559 = vmatmul.mubr.bf16.gmra.mxu0 %v521
    %v560 = vpop.f32.mrf.mxu0
    %v561 = vadd.f32 0.0, %v560
    %v562 = vpop.f32.mrf.mxu0
    %v563 = vpop.f32.mrf.mxu0
    %v564 = vadd.f32 0.0, %v563
    %v565 = vpop.f32.mrf.mxu0
    %566 = vmatprep.mubr.bf16.mxu0 0
    %567 = vmatmul.mubr.bf16.gmra.mxu0 %v524
    %v568 = vpop.f32.mrf.mxu0
    %v569 = vadd.f32 0.0, %v568
    %v570 = vpop.f32.mrf.mxu0
    %v571 = vpop.f32.mrf.mxu0
    %v572 = vpop.f32.mrf.mxu0
    %573 = vdwg.mxu0
    %v574 = vld [vmem:[#allocation7] sm:$0xf]
    %v575 = vld [vmem:[#allocation7 + $0x4] sm:$0xf]
    %v576 = vld [vmem:[#allocation7 + $0x8] sm:$0xf]
    %v577 = vld [vmem:[#allocation7 + $0xc] sm:$0xf]
    %v578 = vld [vmem:[#allocation7 + $0x10] sm:$0xf]
    %v579 = vld [vmem:[#allocation7 + $0x14] sm:$0xf]
    %v580 = vld [vmem:[#allocation7 + $0x18] sm:$0xf]
    %v581 = vld [vmem:[#allocation7 + $0x1c] sm:$0xf]
    %v582 = vld [vmem:[#allocation7 + $0x20] sm:$0xf]
    %v583 = vld [vmem:[#allocation7 + $0x24] sm:$0xf]
    %v584 = vld [vmem:[#allocation7 + $0x28] sm:$0xf]
    %v585 = vld [vmem:[#allocation7 + $0x2c] sm:$0xf]
    %v586 = vld [vmem:[#allocation7 + $0x30] sm:$0xf]
    %v587 = vld [vmem:[#allocation7 + $0x34] sm:$0xf]
    %v588 = vld [vmem:[#allocation7 + $0x38] sm:$0xf]
    %v589 = vld [vmem:[#allocation7 + $0x3c] sm:$0xf]
    %v590 = vld [vmem:[#allocation7 + $0x40] sm:$0xf]
    %v591 = vld [vmem:[#allocation7 + $0x44] sm:$0xf]
    %v592 = vld [vmem:[#allocation7 + $0x48] sm:$0xf]
    %v593 = vld [vmem:[#allocation7 + $0x4c] sm:$0xf]
    %v594 = vld [vmem:[#allocation7 + $0x50] sm:$0xf]
    %v595 = vld [vmem:[#allocation7 + $0x54] sm:$0xf]
    %v596 = vld [vmem:[#allocation7 + $0x58] sm:$0xf]
    %v597 = vld [vmem:[#allocation7 + $0x5c] sm:$0xf]
    %v598 = vld [vmem:[#allocation7 + $0x60] sm:$0xf]
    %v599 = vld [vmem:[#allocation7 + $0x64] sm:$0xf]
    %v600 = vld [vmem:[#allocation7 + $0x68] sm:$0xf]
    %v601 = vld [vmem:[#allocation7 + $0x6c] sm:$0xf]
    %v602 = vld [vmem:[#allocation7 + $0x70] sm:$0xf]
    %v603 = vld [vmem:[#allocation7 + $0x74] sm:$0xf]
    %v604 = vld [vmem:[#allocation7 + $0x78] sm:$0xf]
    %v605 = vld [vmem:[#allocation7 + $0x7c] sm:$0xf]
    %v606 = vld [vmem:[#allocation7 + $0x80] sm:$0xf]
    %v607 = vld [vmem:[#allocation7 + $0x84] sm:$0xf]
    %v608 = vld [vmem:[#allocation7 + $0x88] sm:$0xf]
    %v609 = vld [vmem:[#allocation7 + $0x8c] sm:$0xf]
    %v610 = vld [vmem:[#allocation7 + $0x90] sm:$0xf]
    %v611 = vld [vmem:[#allocation7 + $0x94] sm:$0xf]
    %v612 = vld [vmem:[#allocation7 + $0x98] sm:$0xf]
    %v613 = vld [vmem:[#allocation7 + $0x9c] sm:$0xf]
    %v614 = vld [vmem:[#allocation7 + $0xa0] sm:$0xf]
    %v615 = vld [vmem:[#allocation7 + $0xa4] sm:$0xf]
    %v616 = vld [vmem:[#allocation7 + $0xa8] sm:$0xf]
    %v617 = vld [vmem:[#allocation7 + $0xac] sm:$0xf]
    %v618 = vld [vmem:[#allocation7 + $0xb0] sm:$0xf]
    %v619 = vld [vmem:[#allocation7 + $0xb4] sm:$0xf]
    %v620 = vld [vmem:[#allocation7 + $0xb8] sm:$0xf]
    %v621 = vld [vmem:[#allocation7 + $0xbc] sm:$0xf]
    %v622 = vpack.c.bf16 %v564, %v561
    %v623 = vpack.c.bf16 %v569, %v569
    %v632 = vunpack.c.l.b16 %v574
    %v633 = vunpack.c.l.b16 %v575
    %v634 = vunpack.c.l.b16 %v576
    %v635 = vunpack.c.l.b16 %v577
    %v636 = vunpack.c.l.b16 %v578
    %v637 = vunpack.c.l.b16 %v579
    %v638 = vunpack.c.l.b16 %v580
    %v639 = vunpack.c.l.b16 %v581
    %v640 = vpack.c.b16 %v633, %v632
    %v641 = vpack.c.b16 %v635, %v634
    %v642 = vpack.c.b16 %v637, %v636
    %v643 = vpack.c.b16 %v639, %v638
    %vm648 = vcmask 523264
    %v650 = vsel %vm648, %v622, 0
    %v653 = vsel %vm648, %v623, 0
    %655 = vmatprep.subr.bf16.mxu0 0
    %656 = vmatpush1.bf16.msra.mxu0 0
    %657 = vmatprep.subr.bf16.mxu0 0
    %658 = vmatpush1.bf16.msra.mxu0 0
    %659 = vmatprep.subr.bf16.mxu0 0
    %660 = vmatpush1.bf16.msra.mxu0 0
    %661 = vmatprep.subr.bf16.mxu0 0
    %662 = vmatpush1.bf16.msra.mxu0 0
    %663 = vmatprep.subr.bf16.mxu0 0
    %664 = vmatpush1.bf16.msra.mxu0 %v643
    %665 = vmatprep.subr.bf16.mxu0 0
    %666 = vmatpush1.bf16.msra.mxu0 %v642
    %667 = vmatprep.subr.bf16.mxu0 0
    %668 = vmatpush1.bf16.msra.mxu0 %v641
    %669 = vmatprep.subr.bf16.mxu0 0
    %670 = vmatpush1.bf16.msra.mxu0 %v640
    %671 = vmatprep.subr.bf16.mxu0 0
    %672 = vmatpush2.bf16.msra.mxu0 0
    %673 = vmatprep.subr.bf16.mxu0 0
    %674 = vmatpush2.bf16.msra.mxu0 0
    %675 = vmatprep.subr.bf16.mxu0 0
    %676 = vmatpush2.bf16.msra.mxu0 0
    %677 = vmatprep.subr.bf16.mxu0 0
    %678 = vmatpush2.bf16.msra.mxu0 0
    %679 = vmatprep.subr.bf16.mxu0 0
    %680 = vmatpush2.bf16.msra.mxu0 0
    %681 = vmatprep.subr.bf16.mxu0 0
    %682 = vmatpush2.bf16.msra.mxu0 0
    %683 = vmatprep.subr.bf16.mxu0 0
    %684 = vmatpush2.bf16.msra.mxu0 0
    %685 = vmatprep.subr.bf16.mxu0 0
    %686 = vmatpush2.bf16.msra.mxu0 0
    %687 = vmatprep.mubr.bf16.mxu0 0
    %688 = vmatmul.mubr.bf16.gmra.mxu0 %v650
    %v689 = vpop.f32.mrf.mxu0
    %v690 = vadd.f32 0.0, %v689
    %v691 = vpop.f32.mrf.mxu0
    %v692 = vpop.f32.mrf.mxu0
    %v693 = vadd.f32 0.0, %v692
    %v694 = vpop.f32.mrf.mxu0
    %695 = vmatprep.mubr.bf16.mxu0 0
    %696 = vmatmul.mubr.bf16.gmra.mxu0 %v653
    %v697 = vpop.f32.mrf.mxu0
    %v698 = vadd.f32 0.0, %v697
    %v699 = vpop.f32.mrf.mxu0
    %v700 = vpop.f32.mrf.mxu0
    %v701 = vpop.f32.mrf.mxu0
    %702 = vdwg.mxu0
    %v703 = vmax.f32 %v690, 0.0
    %v704 = vmax.f32 %v693, 0.0
    %v705 = vmax.f32 %v698, 0.0
    %v714 = vunpack.c.l.b16 %v582
    %v715 = vunpack.c.l.b16 %v583
    %v716 = vunpack.c.l.b16 %v584
    %v717 = vunpack.c.l.b16 %v585
    %v718 = vunpack.c.l.b16 %v586
    %v719 = vunpack.c.l.b16 %v587
    %v720 = vunpack.c.l.b16 %v588
    %v721 = vunpack.c.l.b16 %v589
    %v722 = vpack.c.b16 %v715, %v714
    %v723 = vpack.c.b16 %v717, %v716
    %v724 = vpack.c.b16 %v719, %v718
    %v725 = vpack.c.b16 %v721, %v720
    %730 = vmatprep.subr.bf16.mxu0 0
    %731 = vmatpush1.bf16.msra.mxu0 0
    %732 = vmatprep.subr.bf16.mxu0 0
    %733 = vmatpush1.bf16.msra.mxu0 0
    %734 = vmatprep.subr.bf16.mxu0 0
    %735 = vmatpush1.bf16.msra.mxu0 0
    %736 = vmatprep.subr.bf16.mxu0 0
    %737 = vmatpush1.bf16.msra.mxu0 0
    %738 = vmatprep.subr.bf16.mxu0 0
    %739 = vmatpush1.bf16.msra.mxu0 %v725
    %740 = vmatprep.subr.bf16.mxu0 0
    %741 = vmatpush1.bf16.msra.mxu0 %v724
    %742 = vmatprep.subr.bf16.mxu0 0
    %743 = vmatpush1.bf16.msra.mxu0 %v723
    %744 = vmatprep.subr.bf16.mxu0 0
    %745 = vmatpush1.bf16.msra.mxu0 %v722
    %746 = vmatprep.subr.bf16.mxu0 0
    %747 = vmatpush2.bf16.msra.mxu0 0
    %748 = vmatprep.subr.bf16.mxu0 0
    %749 = vmatpush2.bf16.msra.mxu0 0
    %750 = vmatprep.subr.bf16.mxu0 0
    %751 = vmatpush2.bf16.msra.mxu0 0
    %752 = vmatprep.subr.bf16.mxu0 0
    %753 = vmatpush2.bf16.msra.mxu0 0
    %754 = vmatprep.subr.bf16.mxu0 0
    %755 = vmatpush2.bf16.msra.mxu0 0
    %756 = vmatprep.subr.bf16.mxu0 0
    %757 = vmatpush2.bf16.msra.mxu0 0
    %758 = vmatprep.subr.bf16.mxu0 0
    %759 = vmatpush2.bf16.msra.mxu0 0
    %760 = vmatprep.subr.bf16.mxu0 0
    %761 = vmatpush2.bf16.msra.mxu0 0
    %762 = vmatprep.mubr.bf16.mxu0 0
    %763 = vmatmul.mubr.bf16.gmra.mxu0 %v650
    %v764 = vpop.f32.mrf.mxu0
    %v765 = vadd.f32 0.0, %v764
    %v766 = vpop.f32.mrf.mxu0
    %v767 = vpop.f32.mrf.mxu0
    %v768 = vadd.f32 0.0, %v767
    %v769 = vpop.f32.mrf.mxu0
    %770 = vmatprep.mubr.bf16.mxu0 0
    %771 = vmatmul.mubr.bf16.gmra.mxu0 %v653
    %v772 = vpop.f32.mrf.mxu0
    %v773 = vadd.f32 0.0, %v772
    %v774 = vpop.f32.mrf.mxu0
    %v775 = vpop.f32.mrf.mxu0
    %v776 = vpop.f32.mrf.mxu0
    %777 = vdwg.mxu0
    %v778 = vpack.c.bf16 %v704, %v703
    %v779 = vpack.c.bf16 %v705, %v705
    %v796 = vunpack.c.l.b16 %v590
    %v797 = vunpack.c.l.b16 %v591
    %v798 = vunpack.c.l.b16 %v592
    %v799 = vunpack.c.l.b16 %v593
    %v800 = vunpack.c.l.b16 %v594
    %v801 = vunpack.c.l.b16 %v595
    %v802 = vunpack.c.l.b16 %v596
    %v803 = vunpack.c.l.b16 %v597
    %v804 = vunpack.c.l.b16 %v598
    %v805 = vunpack.c.l.b16 %v599
    %v806 = vunpack.c.l.b16 %v600
    %v807 = vunpack.c.l.b16 %v601
    %v808 = vunpack.c.l.b16 %v602
    %v809 = vunpack.c.l.b16 %v603
    %v810 = vunpack.c.l.b16 %v604
    %v811 = vunpack.c.l.b16 %v605
    %v812 = vpack.c.b16 %v797, %v796
    %v813 = vpack.c.b16 %v799, %v798
    %v814 = vpack.c.b16 %v801, %v800
    %v815 = vpack.c.b16 %v803, %v802
    %v816 = vpack.c.b16 %v805, %v804
    %v817 = vpack.c.b16 %v807, %v806
    %v818 = vpack.c.b16 %v809, %v808
    %v819 = vpack.c.b16 %v811, %v810
    %828 = vmatprep.subr.bf16.mxu0 0
    %829 = vmatpush1.bf16.msra.mxu0 %v819
    %830 = vmatprep.subr.bf16.mxu0 0
    %831 = vmatpush1.bf16.msra.mxu0 %v818
    %832 = vmatprep.subr.bf16.mxu0 0
    %833 = vmatpush1.bf16.msra.mxu0 %v817
    %834 = vmatprep.subr.bf16.mxu0 0
    %835 = vmatpush1.bf16.msra.mxu0 %v816
    %836 = vmatprep.subr.bf16.mxu0 0
    %837 = vmatpush1.bf16.msra.mxu0 %v815
    %838 = vmatprep.subr.bf16.mxu0 0
    %839 = vmatpush1.bf16.msra.mxu0 %v814
    %840 = vmatprep.subr.bf16.mxu0 0
    %841 = vmatpush1.bf16.msra.mxu0 %v813
    %842 = vmatprep.subr.bf16.mxu0 0
    %843 = vmatpush1.bf16.msra.mxu0 %v812
    %844 = vmatprep.subr.bf16.mxu0 0
    %845 = vmatpush2.bf16.msra.mxu0 0
    %846 = vmatprep.subr.bf16.mxu0 0
    %847 = vmatpush2.bf16.msra.mxu0 0
    %848 = vmatprep.subr.bf16.mxu0 0
    %849 = vmatpush2.bf16.msra.mxu0 0
    %850 = vmatprep.subr.bf16.mxu0 0
    %851 = vmatpush2.bf16.msra.mxu0 0
    %852 = vmatprep.subr.bf16.mxu0 0
    %853 = vmatpush2.bf16.msra.mxu0 0
    %854 = vmatprep.subr.bf16.mxu0 0
    %855 = vmatpush2.bf16.msra.mxu0 0
    %856 = vmatprep.subr.bf16.mxu0 0
    %857 = vmatpush2.bf16.msra.mxu0 0
    %858 = vmatprep.subr.bf16.mxu0 0
    %859 = vmatpush2.bf16.msra.mxu0 0
    %860 = vmatprep.mubr.bf16.mxu0 0
    %861 = vmatmul.mubr.bf16.gmra.mxu0 %v778
    %v862 = vpop.f32.mrf.mxu0
    %v863 = vadd.f32 0.0, %v862
    %v864 = vpop.f32.mrf.mxu0
    %v865 = vpop.f32.mrf.mxu0
    %v866 = vadd.f32 0.0, %v865
    %v867 = vpop.f32.mrf.mxu0
    %868 = vmatprep.mubr.bf16.mxu0 0
    %869 = vmatmul.mubr.bf16.gmra.mxu0 %v779
    %v870 = vpop.f32.mrf.mxu0
    %v871 = vadd.f32 0.0, %v870
    %v872 = vpop.f32.mrf.mxu0
    %v873 = vpop.f32.mrf.mxu0
    %v874 = vpop.f32.mrf.mxu0
    %875 = vdwg.mxu0
    %v876 = vmax.f32 %v863, 0.0
    %v877 = vmax.f32 %v866, 0.0
    %v878 = vmax.f32 %v871, 0.0
    %v879 = vpack.c.bf16 %v877, %v876
    %v880 = vpack.c.bf16 %v878, %v878
    %v897 = vunpack.c.l.b16 %v606
    %v898 = vunpack.c.l.b16 %v607
    %v899 = vunpack.c.l.b16 %v608
    %v900 = vunpack.c.l.b16 %v609
    %v901 = vunpack.c.l.b16 %v610
    %v902 = vunpack.c.l.b16 %v611
    %v903 = vunpack.c.l.b16 %v612
    %v904 = vunpack.c.l.b16 %v613
    %v905 = vunpack.c.l.b16 %v614
    %v906 = vunpack.c.l.b16 %v615
    %v907 = vunpack.c.l.b16 %v616
    %v908 = vunpack.c.l.b16 %v617
    %v909 = vunpack.c.l.b16 %v618
    %v910 = vunpack.c.l.b16 %v619
    %v911 = vunpack.c.l.b16 %v620
    %v912 = vunpack.c.l.b16 %v621
    %v913 = vpack.c.b16 %v898, %v897
    %v914 = vpack.c.b16 %v900, %v899
    %v915 = vpack.c.b16 %v902, %v901
    %v916 = vpack.c.b16 %v904, %v903
    %v917 = vpack.c.b16 %v906, %v905
    %v918 = vpack.c.b16 %v908, %v907
    %v919 = vpack.c.b16 %v910, %v909
    %v920 = vpack.c.b16 %v912, %v911
    %929 = vmatprep.subr.bf16.mxu0 0
    %930 = vmatpush1.bf16.msra.mxu0 %v920
    %931 = vmatprep.subr.bf16.mxu0 0
    %932 = vmatpush1.bf16.msra.mxu0 %v919
    %933 = vmatprep.subr.bf16.mxu0 0
    %934 = vmatpush1.bf16.msra.mxu0 %v918
    %935 = vmatprep.subr.bf16.mxu0 0
    %936 = vmatpush1.bf16.msra.mxu0 %v917
    %937 = vmatprep.subr.bf16.mxu0 0
    %938 = vmatpush1.bf16.msra.mxu0 %v916
    %939 = vmatprep.subr.bf16.mxu0 0
    %940 = vmatpush1.bf16.msra.mxu0 %v915
    %941 = vmatprep.subr.bf16.mxu0 0
    %942 = vmatpush1.bf16.msra.mxu0 %v914
    %943 = vmatprep.subr.bf16.mxu0 0
    %944 = vmatpush1.bf16.msra.mxu0 %v913
    %945 = vmatprep.subr.bf16.mxu0 0
    %946 = vmatpush2.bf16.msra.mxu0 0
    %947 = vmatprep.subr.bf16.mxu0 0
    %948 = vmatpush2.bf16.msra.mxu0 0
    %949 = vmatprep.subr.bf16.mxu0 0
    %950 = vmatpush2.bf16.msra.mxu0 0
    %951 = vmatprep.subr.bf16.mxu0 0
    %952 = vmatpush2.bf16.msra.mxu0 0
    %953 = vmatprep.subr.bf16.mxu0 0
    %954 = vmatpush2.bf16.msra.mxu0 0
    %955 = vmatprep.subr.bf16.mxu0 0
    %956 = vmatpush2.bf16.msra.mxu0 0
    %957 = vmatprep.subr.bf16.mxu0 0
    %958 = vmatpush2.bf16.msra.mxu0 0
    %959 = vmatprep.subr.bf16.mxu0 0
    %960 = vmatpush2.bf16.msra.mxu0 0
    %961 = vmatprep.mubr.bf16.mxu0 0
    %962 = vmatmul.mubr.bf16.gmra.mxu0 %v879
    %v963 = vpop.f32.mrf.mxu0
    %v964 = vadd.f32 0.0, %v963
    %v965 = vpop.f32.mrf.mxu0
    %v966 = vpop.f32.mrf.mxu0
    %v967 = vadd.f32 0.0, %v966
    %v968 = vpop.f32.mrf.mxu0
    %969 = vmatprep.mubr.bf16.mxu0 0
    %970 = vmatmul.mubr.bf16.gmra.mxu0 %v880
    %v971 = vpop.f32.mrf.mxu0
    %v972 = vadd.f32 0.0, %v971
    %v973 = vpop.f32.mrf.mxu0
    %v974 = vpop.f32.mrf.mxu0
    %v975 = vpop.f32.mrf.mxu0
    %976 = vdwg.mxu0
    %v977 = vmax.f32 %v964, 0.0
    %v978 = vmax.f32 %v967, 0.0
    %v979 = vmax.f32 %v972, 0.0
    %v980 = vadd.f32 %v977, %v765
    %v981 = vadd.f32 %v978, %v768
    %v982 = vadd.f32 %v979, %v773
    %v983 = vpack.c.bf16 %v981, %v980
    %v984 = vpack.c.bf16 %v982, %v982
    %986 = vrot.lane.b32.xlu0 %v984, 64
    %v987 = vpop.permute.xlu0 %986
    %v989 = vsel %vm648, %v983, 0
    %v992 = vsel %vm648, %v987, 0
    %994 = vmatprep.subr.bf16.mxu0 0
    %995 = vmatpush1.bf16.xpose.msra.mxu0 0
    %996 = vmatprep.subr.bf16.mxu0 0
    %997 = vmatpush1.bf16.xpose.msra.mxu0 0
    %998 = vmatprep.subr.bf16.mxu0 0
    %999 = vmatpush1.bf16.xpose.msra.mxu0 0
    %1000 = vmatprep.subr.bf16.mxu0 0
    %1001 = vmatpush1.bf16.xpose.msra.mxu0 0
    %1002 = vmatprep.subr.bf16.mxu0 0
    %1003 = vmatpush1.bf16.xpose.msra.mxu0 0
    %1004 = vmatprep.subr.bf16.mxu0 0
    %1005 = vmatpush1.bf16.xpose.msra.mxu0 0
    %1006 = vmatprep.subr.bf16.mxu0 0
    %1007 = vmatpush1.bf16.xpose.msra.mxu0 0
    %1008 = vmatprep.subr.bf16.mxu0 0
    %1009 = vmatpush1.bf16.xpose.msra.mxu0 %v992
    %1010 = vmatprep.subr.bf16.mxu0 0
    %1011 = vmatpush2.bf16.xpose.msra.mxu0 0
    %1012 = vmatprep.subr.bf16.mxu0 0
    %1013 = vmatpush2.bf16.xpose.msra.mxu0 0
    %1014 = vmatprep.subr.bf16.mxu0 0
    %1015 = vmatpush2.bf16.xpose.msra.mxu0 0
    %1016 = vmatprep.subr.bf16.mxu0 0
    %1017 = vmatpush2.bf16.xpose.msra.mxu0 0
    %1018 = vmatprep.subr.bf16.mxu0 0
    %1019 = vmatpush2.bf16.xpose.msra.mxu0 0
    %1020 = vmatprep.subr.bf16.mxu0 0
    %1021 = vmatpush2.bf16.xpose.msra.mxu0 0
    %1022 = vmatprep.subr.bf16.mxu0 0
    %1023 = vmatpush2.bf16.xpose.msra.mxu0 0
    %1024 = vmatprep.subr.bf16.mxu0 0
    %1025 = vmatpush2.bf16.xpose.msra.mxu0 0
    %1026 = vmatprep.mubr.bf16.mxu0 0
    %1027 = vmatmul.mubr.bf16.gmra.mxu0 %v989
    %v1028 = vpop.f32.mrf.mxu0
    %v1029 = vadd.f32 0.0, %v1028
    %v1030 = vpop.f32.mrf.mxu0
    %v1031 = vpop.f32.mrf.mxu0
    %v1032 = vadd.f32 0.0, %v1031
    %v1033 = vpop.f32.mrf.mxu0
    %1034 = vdwg.mxu0
    %v1035 = vld [vmem:[#allocation2 + $0x1c] sm:$0xf]
    %v1036 = vld [vmem:[#allocation2 + $0x20] sm:$0xf]
    %v1037 = vunpack.c.l.bf16 %v1035
    %v1038 = vunpack.c.l.bf16 %v1036
    %v1039 = vsub.f32 1.0, %v1037
    %v1040 = vsub.f32 1.0, %v1038
    %v1041 = vsub.f32 0.0, %v1029
    %v1042 = vsub.f32 0.0, %v1032
    %v1043 = vmax.f32 %v1041, 0.0
    %v1044 = vmax.f32 %v1042, 0.0
    %v1045 = vand.u32 2147483647, %v1041
    %v1046 = vand.u32 2147483647, %v1042
    %v1047 = vsub.f32 0.0, %v1045
    %v1048 = vsub.f32 0.0, %v1046
    %v1049 = vmul.f32 %v1047, 1.442695
    %v1050 = vpow.pop %v1049
    %v1051 = vmul.f32 %v1048, 1.442695
    %v1052 = vpow.pop %v1051
    %v1053 = vadd.f32 %v1050, 1.0
    %v1054 = vlog2.pop %v1053
    %v1055 = vmul.f32 %v1054, 0.6931472
    %v1056 = vmul.f32 -0.5, %v1050
    %v1057 = vadd.f32 %v1056, 1.0
    %v1058 = vmul.f32 %v1057, %v1050
    %v1059 = vand.u32 2147483647, %v1050
    %vm1060 = vcmp.lt.f32.partialorder %v1059, 0.0004427343
    %v1061 = vsel %vm1060, %v1058, %v1055
    %v1062 = vadd.f32 %v1052, 1.0
    %v1063 = vlog2.pop %v1062
    %v1064 = vmul.f32 %v1063, 0.6931472
    %v1065 = vmul.f32 -0.5, %v1052
    %v1066 = vadd.f32 %v1065, 1.0
    %v1067 = vmul.f32 %v1066, %v1052
    %v1068 = vand.u32 2147483647, %v1052
    %vm1069 = vcmp.lt.f32.partialorder %v1068, 0.0004427343
    %v1070 = vsel %vm1069, %v1067, %v1064
    %v1071 = vadd.f32 %v1043, %v1061
    %v1072 = vadd.f32 %v1044, %v1070
    %v1073 = vsub.f32 0.6931472, %v1071
    %v1074 = vsub.f32 0.6931472, %v1072
    %v1075 = vmul.f32 %v1037, %v1073
    %v1076 = vmul.f32 %v1038, %v1074
    %vm1077 = vcmask 15360
    %v1078 = vsel %vm1077, %v1075, 0.0
    %v1079 = vsel %vm1077, %v1076, 0.0
    %v1080 = vadd.f32 %v1078, %v1079
    %1081 = vadd.xlane.f32.xlu0 %v1080
    %v1082 = vpop.xlane.xlu0 %1081
    %v1083 = vrot.slane %v1082, 4
    %v1084 = vadd.f32 %v1082, %v1083
    %v1085 = vrot.slane %v1084, 2
    %v1086 = vadd.f32 %v1084, %v1085
    %v1087 = vrot.slane %v1086, 1
    %v1088 = vadd.f32 %v1086, %v1087
    %s1089 = vtos %v1088
    %v1090 = vadd.f32 %v1071, %v1029
    %v1091 = vadd.f32 %v1072, %v1032
    %v1092 = vsub.f32 %v1090, 0.6931472
    %v1093 = vsub.f32 %v1091, 0.6931472
    %v1094 = vmul.f32 %v1039, %v1092
    %v1095 = vmul.f32 %v1040, %v1093
    %v1096 = vsel %vm1077, %v1094, 0.0
    %v1097 = vsel %vm1077, %v1095, 0.0
    %v1098 = vadd.f32 %v1096, %v1097
    %1099 = vadd.xlane.f32.xlu0 %v1098
    %v1100 = vpop.xlane.xlu0 %1099
    %v1101 = vrot.slane %v1100, 4
    %v1102 = vadd.f32 %v1100, %v1101
    %v1103 = vrot.slane %v1102, 2
    %v1104 = vadd.f32 %v1102, %v1103
    %v1105 = vrot.slane %v1104, 1
    %v1106 = vadd.f32 %v1104, %v1105
    %s1107 = vtos %v1106
    %v1108 = vrcp.pop 16.0
    %s1109 = vtos %v1108
    %s1110 = smul.f32 %s1107, %s1109
    %v1111 = vrcp.pop 16.0
    %s1112 = vtos %v1111
    %s1113 = smul.f32 %s1089, %s1112
    %s1114 = ssub.f32 %s1110, %s1113
    %s1115 = scalar_lea.smem [#allocation8], 0
    %1116 = sst [smem:[%s1115]] %s1114
    // Predicated region
    $region26: #{tpu_custom_call.1} parent=1 // pred_check
      _
    $region27: #{tpu_custom_call.1} parent=1 // pred_check_branch
      %1118 = sbr.rel (0) target = $region29
    $region28: #{tpu_custom_call.1} parent=1 // pred_region
      %s1120 = ssub.s32 16, 16
      %1121 = vsyncadd [#allocation4], %s1120
      %1124 = dma.smem_to_hbm [#allocation8], 16, %s3, [#allocation4]
    $region29: #{tpu_custom_call.1} parent=1 // pred_fallthru
      _
    // Predicated region
    $region30: #{tpu_custom_call.1} parent=1 // pred_check
      _
    $region31: #{tpu_custom_call.1} parent=1 // pred_check_branch
      %1126 = sbr.rel (0) target = $region33
    $region32: #{tpu_custom_call.1} parent=1 // pred_region
      %1127 = dma.done [#allocation4], 16
    $region33: #{tpu_custom_call.1} parent=1 // pred_fallthru
      _
    %1128 = sfence
    %1129 = vsyncpa [#allocation3], 1
    %1130 = vsyncpa [#allocation6], 1
    %1131 = vsyncpa [#allocation4], 1

</llo_original>
